<compile_context>
chip_gen: v7x
topology: tpu7x:2x2x1
jax: 0.10.0
libtpu: 0.0.40
codegen_flags: <defaults>
</compile_context>

<pallas_src>
import jax
import jax.numpy as jnp
from jax.experimental import pallas as pl
from jax.experimental.pallas import tpu as pltpu

HIDDEN = 64


def _round_up(n, m):
    return ((n + m - 1) // m) * m


def dqn_kernel(x_ref, w1_ref, b1_ref, w2_ref, b2_ref, w3_ref, b3_ref, o_ref):
    # One (tb, F) batch tile per grid step; weights/biases stay VMEM-resident
    # (constant index_map) across all grid steps.
    x = x_ref[...].astype(jnp.bfloat16)  # cast in-kernel: no extra XLA pass over x
    h = jnp.dot(x, w1_ref[...], preferred_element_type=jnp.float32) + b1_ref[...]
    h = jnp.maximum(h, 0.0)
    h = jnp.dot(h.astype(jnp.bfloat16), w2_ref[...],
                preferred_element_type=jnp.float32) + b2_ref[...]
    h = jnp.maximum(h, 0.0)
    out = jnp.dot(h.astype(jnp.bfloat16), w3_ref[...],
                  preferred_element_type=jnp.float32) + b3_ref[...]
    o_ref[...] = out.astype(o_ref.dtype)  # real (tb, A) store, masked vst on edge tiles


def prepare_params(params):
    """One-time parameter prep (call at init / target-network sync, NOT per step):
    bf16 weights in (fan_in, fan_out) layout, f32 biases as (1, fan_out)."""
    w1, b1, w2, b2, w3, b3 = params
    return (w1.astype(jnp.bfloat16), b1.reshape(1, -1).astype(jnp.float32),
            w2.astype(jnp.bfloat16), b2.reshape(1, -1).astype(jnp.float32),
            w3.astype(jnp.bfloat16), b3.reshape(1, -1).astype(jnp.float32))


def dqn_forward(x, prepared_params, *, tile_b_cap=512, vmem_budget_bytes=16 << 20):
    w1, b1, w2, b2, w3, b3 = prepared_params
    B, F = x.shape
    A = w3.shape[1]

    # Batch tile: >=2 grid steps when B allows (so v7x's two TensorCores both get
    # work), 8-sublane aligned, capped at tile_b_cap.
    tb = min(tile_b_cap, max(8, _round_up(pl.cdiv(B, 2), 8)))

    def vmem_bytes(tb_):
        x_bytes = 2 * tb_ * F * x.dtype.itemsize                      # double-buffered x tile
        o_bytes = 2 * tb_ * A * 4                                     # double-buffered out tile
        w_bytes = 2 * (F * HIDDEN + HIDDEN * HIDDEN + HIDDEN * A)     # resident bf16 weights
        b_bytes = 4 * (HIDDEN + HIDDEN + A)                           # resident f32 biases
        return x_bytes + o_bytes + w_bytes + b_bytes

    # Guard the VMEM budget (important for v7x's smaller VMEM / large in_features).
    while tb > 8 and vmem_bytes(tb) > vmem_budget_bytes:
        tb = max(8, _round_up(tb // 2, 8))
    # TODO(synk): for very large in_features (flattened Atari frames), tile the
    # layer-1 contraction over F with an "arbitrary" grid axis + f32 VMEM
    # accumulator instead of shrinking tb further.

    grid = (pl.cdiv(B, tb),)
    resident = lambda shape: pl.BlockSpec(shape, lambda i: (0, 0))

    flops = 2 * B * (F * HIDDEN + HIDDEN * HIDDEN + HIDDEN * A)
    bytes_accessed = (
        B * F * x.dtype.itemsize                                   # x in
        + B * A * 4                                                # out (f32)
        + 2 * (F * HIDDEN + HIDDEN * HIDDEN + HIDDEN * A)          # bf16 weights
        + 4 * (HIDDEN + HIDDEN + A)                                # f32 biases
    )

    return pl.pallas_call(
        dqn_kernel,
        out_shape=jax.ShapeDtypeStruct((B, A), jnp.float32),
        grid=grid,
        in_specs=[
            pl.BlockSpec((tb, F), lambda i: (i, 0)),   # batch-tiled activations
            resident(w1.shape), resident(b1.shape),
            resident(w2.shape), resident(b2.shape),
            resident(w3.shape), resident(b3.shape),
        ],
        out_specs=pl.BlockSpec((tb, A), lambda i: (i, 0)),
        compiler_params=pltpu.CompilerParams(
            dimension_semantics=("parallel",),
            vmem_limit_bytes=max(vmem_budget_bytes, 32 << 20),
        ),
        cost_estimate=pl.CostEstimate(
            flops=flops, transcendentals=0, bytes_accessed=bytes_accessed),
    )(x, w1, b1, w2, b2, w3, b3)


def init_params(key, in_features, num_actions, hidden=HIDDEN):
    # Deterministic init mimicking nn.Linear's U(-1/sqrt(fan_in), 1/sqrt(fan_in)).
    def linear(k, fan_in, fan_out):
        kw, kb = jax.random.split(k)
        bound = 1.0 / jnp.sqrt(jnp.float32(fan_in))
        w = jax.random.uniform(kw, (fan_in, fan_out), jnp.float32, -bound, bound)
        b = jax.random.uniform(kb, (1, fan_out), jnp.float32, -bound, bound)
        return w, b

    k1, k2, k3 = jax.random.split(key, 3)
    w1, b1 = linear(k1, in_features, hidden)
    w2, b2 = linear(k2, hidden, hidden)
    w3, b3 = linear(k3, hidden, num_actions)
    return (w1, b1, w2, b2, w3, b3)


def ref_forward(x, params):
    # Pure-JAX reference mirroring the kernel's bf16-in / f32-accumulate numerics.
    w1, b1, w2, b2, w3, b3 = params
    bf = lambda a: a.astype(jnp.bfloat16).astype(jnp.float32)
    h = jnp.maximum(jnp.dot(bf(x), bf(w1)) + b1, 0.0)
    h = jnp.maximum(jnp.dot(bf(h), bf(w2)) + b2, 0.0)
    return jnp.dot(bf(h), bf(w3)) + b3


if __name__ == "__main__":
    key = jax.random.PRNGKey(0)
    kx, kp = jax.random.split(key)

    batch = 8
    in_features = 16
    num_actions = 4

    x = jax.random.normal(kx, (batch, in_features), dtype=jnp.float32)
    params = init_params(kp, in_features, num_actions)
    prepared = prepare_params(params)   # hoisted: done once, not per forward call

    out = dqn_forward(x, prepared)
    out = jax.block_until_ready(out)

    ref = ref_forward(x, params)
    assert out.shape == (batch, num_actions)
    assert jnp.allclose(out, ref, atol=1e-3, rtol=1e-3), (
        jnp.max(jnp.abs(out - ref)))

    print("KERNEL_OK")
</pallas_src>

<mosaic_0001>
module attributes {stable_mosaic.version = 11 : i64} {
  func.func @dqn_kernel(%arg0: i32, %arg1: memref<8x16xf32, #tpu.memory_space<vmem>>, %arg2: memref<16x64xbf16, #tpu.memory_space<vmem>>, %arg3: memref<1x64xf32, #tpu.memory_space<vmem>>, %arg4: memref<64x64xbf16, #tpu.memory_space<vmem>>, %arg5: memref<1x64xf32, #tpu.memory_space<vmem>>, %arg6: memref<64x4xbf16, #tpu.memory_space<vmem>>, %arg7: memref<1x4xf32, #tpu.memory_space<vmem>>, %arg8: memref<8x4xf32, #tpu.memory_space<vmem>>) attributes {dimension_semantics = [#tpu.dimension_semantics<parallel>], iteration_bounds = array<i64: 1>, scalar_prefetch = 0 : i64, scratch_operands = 0 : i64, tpu.core_type = #tpu.core_type<tc>, window_params = [{transform_indices = @transform_0, window_bounds = array<i64: 8, 16>}, {pipeline_mode = #tpu.pipeline_mode<synchronous>, transform_indices = @transform_1, window_bounds = array<i64: 16, 64>}, {pipeline_mode = #tpu.pipeline_mode<synchronous>, transform_indices = @transform_2, window_bounds = array<i64: 1, 64>}, {pipeline_mode = #tpu.pipeline_mode<synchronous>, transform_indices = @transform_3, window_bounds = array<i64: 64, 64>}, {pipeline_mode = #tpu.pipeline_mode<synchronous>, transform_indices = @transform_4, window_bounds = array<i64: 1, 64>}, {pipeline_mode = #tpu.pipeline_mode<synchronous>, transform_indices = @transform_5, window_bounds = array<i64: 64, 4>}, {pipeline_mode = #tpu.pipeline_mode<synchronous>, transform_indices = @transform_6, window_bounds = array<i64: 1, 4>}, {transform_indices = @transform_7, window_bounds = array<i64: 8, 4>}]} {
    %c0 = arith.constant 0 : index
    %c0_0 = arith.constant 0 : index
    %0 = vector.load %arg1[%c0, %c0_0] : memref<8x16xf32, #tpu.memory_space<vmem>>, vector<8x16xf32>
    %1 = arith.truncf %0 : vector<8x16xf32> to vector<8x16xbf16>
    %c0_1 = arith.constant 0 : index
    %c0_2 = arith.constant 0 : index
    %2 = vector.load %arg2[%c0_1, %c0_2] : memref<16x64xbf16, #tpu.memory_space<vmem>>, vector<16x64xbf16>
    %cst = arith.constant dense<0.000000e+00> : vector<8x64xf32>
    %3 = tpu.matmul %1, %2, %cst {dimension_numbers = #tpu.dot_dimension_numbers<[1], [0], [0], [1], [0, 0, 1, 1], [], []>} : vector<8x16xbf16>, vector<16x64xbf16>, vector<8x64xf32> -> vector<8x64xf32>
    %c0_3 = arith.constant 0 : index
    %c0_4 = arith.constant 0 : index
    %4 = vector.load %arg3[%c0_3, %c0_4] : memref<1x64xf32, #tpu.memory_space<vmem>>, vector<1x64xf32>
    %5 = vector.broadcast %4 : vector<1x64xf32> to vector<8x64xf32>
    %6 = arith.addf %3, %5 : vector<8x64xf32>
    %cst_5 = arith.constant 0.000000e+00 : f32
    %7 = vector.broadcast %cst_5 : f32 to vector<8x64xf32>
    %8 = arith.maximumf %6, %7 : vector<8x64xf32>
    %9 = arith.truncf %8 : vector<8x64xf32> to vector<8x64xbf16>
    %c0_6 = arith.constant 0 : index
    %c0_7 = arith.constant 0 : index
    %10 = vector.load %arg4[%c0_6, %c0_7] : memref<64x64xbf16, #tpu.memory_space<vmem>>, vector<64x64xbf16>
    %cst_8 = arith.constant dense<0.000000e+00> : vector<8x64xf32>
    %11 = tpu.matmul %9, %10, %cst_8 {dimension_numbers = #tpu.dot_dimension_numbers<[1], [0], [0], [1], [0, 0, 1, 1], [], []>} : vector<8x64xbf16>, vector<64x64xbf16>, vector<8x64xf32> -> vector<8x64xf32>
    %c0_9 = arith.constant 0 : index
    %c0_10 = arith.constant 0 : index
    %12 = vector.load %arg5[%c0_9, %c0_10] : memref<1x64xf32, #tpu.memory_space<vmem>>, vector<1x64xf32>
    %13 = vector.broadcast %12 : vector<1x64xf32> to vector<8x64xf32>
    %14 = arith.addf %11, %13 : vector<8x64xf32>
    %cst_11 = arith.constant 0.000000e+00 : f32
    %15 = vector.broadcast %cst_11 : f32 to vector<8x64xf32>
    %16 = arith.maximumf %14, %15 : vector<8x64xf32>
    %17 = arith.truncf %16 : vector<8x64xf32> to vector<8x64xbf16>
    %c0_12 = arith.constant 0 : index
    %c0_13 = arith.constant 0 : index
    %18 = vector.load %arg6[%c0_12, %c0_13] : memref<64x4xbf16, #tpu.memory_space<vmem>>, vector<64x4xbf16>
    %cst_14 = arith.constant dense<0.000000e+00> : vector<8x4xf32>
    %19 = tpu.matmul %17, %18, %cst_14 {dimension_numbers = #tpu.dot_dimension_numbers<[1], [0], [0], [1], [0, 0, 1, 1], [], []>} : vector<8x64xbf16>, vector<64x4xbf16>, vector<8x4xf32> -> vector<8x4xf32>
    %c0_15 = arith.constant 0 : index
    %c0_16 = arith.constant 0 : index
    %20 = vector.load %arg7[%c0_15, %c0_16] : memref<1x4xf32, #tpu.memory_space<vmem>>, vector<1x4xf32>
    %21 = vector.broadcast %20 : vector<1x4xf32> to vector<8x4xf32>
    %22 = arith.addf %19, %21 : vector<8x4xf32>
    %c0_17 = arith.constant 0 : index
    %c0_18 = arith.constant 0 : index
    %23 = vector.load %arg8[%c0_17, %c0_18] : memref<8x4xf32, #tpu.memory_space<vmem>>, vector<8x4xf32>
    tpu.vector_store %arg8[%c0_17, %c0_18], %22 {strides = array<i32>} : memref<8x4xf32, #tpu.memory_space<vmem>>, vector<8x4xf32>,
    return
  }
  func.func @transform_0(%arg0: i32) -> (i32, i32) {
    %c0_i32 = arith.constant 0 : i32
    %c0_i32_0 = arith.constant 0 : i32
    return %arg0, %c0_i32 : i32, i32
  }
  func.func @transform_1(%arg0: i32) -> (i32, i32) {
    %c0_i32 = arith.constant 0 : i32
    %c0_i32_0 = arith.constant 0 : i32
    %c0_i32_1 = arith.constant 0 : i32
    return %c0_i32, %c0_i32_0 : i32, i32
  }
  func.func @transform_2(%arg0: i32) -> (i32, i32) {
    %c0_i32 = arith.constant 0 : i32
    %c0_i32_0 = arith.constant 0 : i32
    %c0_i32_1 = arith.constant 0 : i32
    return %c0_i32, %c0_i32_0 : i32, i32
  }
  func.func @transform_3(%arg0: i32) -> (i32, i32) {
    %c0_i32 = arith.constant 0 : i32
    %c0_i32_0 = arith.constant 0 : i32
    %c0_i32_1 = arith.constant 0 : i32
    return %c0_i32, %c0_i32_0 : i32, i32
  }
  func.func @transform_4(%arg0: i32) -> (i32, i32) {
    %c0_i32 = arith.constant 0 : i32
    %c0_i32_0 = arith.constant 0 : i32
    %c0_i32_1 = arith.constant 0 : i32
    return %c0_i32, %c0_i32_0 : i32, i32
  }
  func.func @transform_5(%arg0: i32) -> (i32, i32) {
    %c0_i32 = arith.constant 0 : i32
    %c0_i32_0 = arith.constant 0 : i32
    %c0_i32_1 = arith.constant 0 : i32
    return %c0_i32, %c0_i32_0 : i32, i32
  }
  func.func @transform_6(%arg0: i32) -> (i32, i32) {
    %c0_i32 = arith.constant 0 : i32
    %c0_i32_0 = arith.constant 0 : i32
    %c0_i32_1 = arith.constant 0 : i32
    return %c0_i32, %c0_i32_0 : i32, i32
  }
  func.func @transform_7(%arg0: i32) -> (i32, i32) {
    %c0_i32 = arith.constant 0 : i32
    %c0_i32_0 = arith.constant 0 : i32
    return %arg0, %c0_i32 : i32, i32
  }
}

</mosaic_0001>

<llo_original>
// kernel: tpu_custom_call.1
$region0: #{tpu_custom_call.1}
  #allocation0 [shape = 'u32[]', space=smem, size = 0x4, offset = 0x4, fixed_abs, tag = 'smem constant byte address 0x4 - core index']
  #allocation1 [shape = 'u32[144,128]{1,0:T(1,128)}', space=vmem, size = 0x12000, scoped, tag = 'internal scratch']
  %s0 = inlined_call_operand.vmem [shape: f32[8,16], index: 0, kind: input, shape index: {}]
  %s1 = inlined_call_operand.hbm [shape: bf16[16,64], index: 1, kind: input, shape index: {}]
  %s2 = inlined_call_operand.vmem [shape: f32[1,64], index: 2, kind: input, shape index: {}]
  %s3 = inlined_call_operand.vmem [shape: bf16[64,64], index: 3, kind: input, shape index: {}]
  %s4 = inlined_call_operand.vmem [shape: f32[1,64], index: 4, kind: input, shape index: {}]
  %s5 = inlined_call_operand.vmem [shape: bf16[64,4], index: 5, kind: input, shape index: {}]
  %s6 = inlined_call_operand.vmem [shape: f32[1,4], index: 6, kind: input, shape index: {}]
  %s7 = inlined_call_operand.vmem [shape: f32[8,4], index: 7, kind: output, shape index: {}]
  %s8 = sld [smem:[#allocation0]]
  $region42: #{tpu_custom_call.1} parent=0
    _
  %s10 = ssub.s32 1, %s8
  %s11 = scalar_select 0, %s10, %s8
  $region1: #{tpu_custom_call.1} parent=0
    #allocation2 [shape = 'u8[4096]{0}', space=vmem, size = 0x1000, scoped, tag = 'input window, operand 1, single buffered']
    #allocation3 [shape = 's32[1]{0}', space=sflag, size = 0x4, scoped, tag = 'scoped memory for tpu_custom_call.1']
    %12 = vsyncpa [#allocation3], 0
    // Predicated region
    $region2: #{tpu_custom_call.1} parent=1 // pred_check
      _
    $region3: #{tpu_custom_call.1} parent=1 // pred_check_branch
      %14 = sbr.rel (0) target = $region5
    $region4: #{tpu_custom_call.1} parent=1 // pred_region
      _
    $region5: #{tpu_custom_call.1} parent=1 // pred_fallthru
      _
    // Predicated region
    $region6: #{tpu_custom_call.1} parent=1 // pred_check
      _
    $region7: #{tpu_custom_call.1} parent=1 // pred_check_branch
      %16 = sbr.rel (0) target = $region9
    $region8: #{tpu_custom_call.1} parent=1 // pred_region
      %s18 = ssub.s32 128, 128
      %19 = vsyncadd [#allocation3], %s18
      %s20 = sshll.u32 [#allocation2], 4
      %s21 = int_to_ptr.vmem [resolvable:$true] %s20
      %26 = dma.hbm_to_vmem [thread:$0]  %s1, 128, %s21, [#allocation3], 64, 64, 4
    $region9: #{tpu_custom_call.1} parent=1 // pred_fallthru
      _
    // Predicated region
    $region10: #{tpu_custom_call.1} parent=1 // pred_check
      _
    $region11: #{tpu_custom_call.1} parent=1 // pred_check_branch
      %28 = sbr.rel (0) target = $region13
    $region12: #{tpu_custom_call.1} parent=1 // pred_region
      _
    $region13: #{tpu_custom_call.1} parent=1 // pred_fallthru
      _
    // Predicated region
    $region14: #{tpu_custom_call.1} parent=1 // pred_check
      _
    $region15: #{tpu_custom_call.1} parent=1 // pred_check_branch
      %30 = sbr.rel (0) target = $region17
    $region16: #{tpu_custom_call.1} parent=1 // pred_region
      _
    $region17: #{tpu_custom_call.1} parent=1 // pred_fallthru
      _
    // Predicated region
    $region18: #{tpu_custom_call.1} parent=1 // pred_check
      _
    $region19: #{tpu_custom_call.1} parent=1 // pred_check_branch
      %32 = sbr.rel (0) target = $region21
    $region20: #{tpu_custom_call.1} parent=1 // pred_region
      _
    $region21: #{tpu_custom_call.1} parent=1 // pred_fallthru
      _
    // Predicated region
    $region22: #{tpu_custom_call.1} parent=1 // pred_check
      _
    $region23: #{tpu_custom_call.1} parent=1 // pred_check_branch
      %34 = sbr.rel (0) target = $region25
    $region24: #{tpu_custom_call.1} parent=1 // pred_region
      _
    $region25: #{tpu_custom_call.1} parent=1 // pred_fallthru
      _
    // Predicated region
    $region26: #{tpu_custom_call.1} parent=1 // pred_check
      _
    $region27: #{tpu_custom_call.1} parent=1 // pred_check_branch
      %36 = sbr.rel (0) target = $region29
    $region28: #{tpu_custom_call.1} parent=1 // pred_region
      _
    $region29: #{tpu_custom_call.1} parent=1 // pred_fallthru
      _
    // Predicated region
    $region30: #{tpu_custom_call.1} parent=1 // pred_check
      _
    $region31: #{tpu_custom_call.1} parent=1 // pred_check_branch
      %38 = sbr.rel (0) target = $region33
    $region32: #{tpu_custom_call.1} parent=1 // pred_region
      %39 = dma.done [#allocation3], 128
    $region33: #{tpu_custom_call.1} parent=1 // pred_fallthru
      _
    %v41 = vld [vmem:[%s0] sm:$0xff]
    %v42 = vpack.c.bf16 %v41, %v41
    %v43 = vld [vmem:[#allocation2] sm:$0xf]
    %v44 = vld [vmem:[#allocation2 + $0x4] sm:$0xf]
    %v45 = vld [vmem:[%s2] sm:$0x1]
    %v47 = vlaneseq
    %v48 = vshrl.u32 %v47, 7
    %v49 = vsub.s32 0, %v48
    %v50 = vrot.slane %v45, %v49
    %v54 = vunpack.c.l.b16 %v43
    %v55 = vunpack.c.l.b16 %v44
    %v56 = vpack.c.b16 %v55, %v54
    %vm58 = vcmask 130048
    %v60 = vsel %vm58, %v42, 0
    %62 = vmatprep.subr.bf16.mxu0 0
    %63 = vmatpush1.bf16.msra.mxu0 %v56
    %64 = vmatprep.subr.bf16.mxu0 0
    %65 = vmatpush1.bf16.msra.mxu0 0
    %66 = vmatprep.subr.bf16.mxu0 0
    %67 = vmatpush1.bf16.msra.mxu0 0
    %68 = vmatprep.subr.bf16.mxu0 0
    %69 = vmatpush1.bf16.msra.mxu0 0
    %70 = vmatprep.subr.bf16.mxu0 0
    %71 = vmatpush1.bf16.msra.mxu0 0
    %72 = vmatprep.subr.bf16.mxu0 0
    %73 = vmatpush1.bf16.msra.mxu0 0
    %74 = vmatprep.subr.bf16.mxu0 0
    %75 = vmatpush1.bf16.msra.mxu0 0
    %76 = vmatprep.subr.bf16.mxu0 0
    %77 = vmatpush1.bf16.msra.mxu0 0
    %78 = vmatprep.subr.bf16.mxu0 0
    %79 = vmatpush1.bf16.msra.mxu0 0
    %80 = vmatprep.subr.bf16.mxu0 0
    %81 = vmatpush1.bf16.msra.mxu0 0
    %82 = vmatprep.subr.bf16.mxu0 0
    %83 = vmatpush1.bf16.msra.mxu0 0
    %84 = vmatprep.subr.bf16.mxu0 0
    %85 = vmatpush1.bf16.msra.mxu0 0
    %86 = vmatprep.subr.bf16.mxu0 0
    %87 = vmatpush1.bf16.msra.mxu0 0
    %88 = vmatprep.subr.bf16.mxu0 0
    %89 = vmatpush1.bf16.msra.mxu0 0
    %90 = vmatprep.subr.bf16.mxu0 0
    %91 = vmatpush1.bf16.msra.mxu0 0
    %92 = vmatprep.subr.bf16.mxu0 0
    %93 = vmatpush1.bf16.msra.mxu0 0
    %94 = vmatprep.mubr.bf16.mxu0 0
    %95 = vmatmul.mubr.bf16.gmra.mrb[0].mxu0 %v60
    %v96 = vpop.f32.mrb[0].mxu0
    %v97 = vadd.f32 %v50, %v96
    %v98 = vpop.f32.mrb[0].mxu0
    %v99 = vpop.f32.mrb[0].mxu0
    %v100 = vpop.f32.mrb[0].mxu0
    %101 = vdwg.mxu0
    %v102 = vmax.f32 %v97, 0.0
    %v103 = vpack.c.bf16 %v102, %v102
    %v104 = vld [vmem:[%s3] sm:$0xf]
    %v105 = vld [vmem:[%s3 + $0x4] sm:$0xf]
    %v106 = vld [vmem:[%s3 + $0x8] sm:$0xf]
    %v107 = vld [vmem:[%s3 + $0xc] sm:$0xf]
    %v108 = vld [vmem:[%s3 + $0x10] sm:$0xf]
    %v109 = vld [vmem:[%s3 + $0x14] sm:$0xf]
    %v110 = vld [vmem:[%s3 + $0x18] sm:$0xf]
    %v111 = vld [vmem:[%s3 + $0x1c] sm:$0xf]
    %v112 = vld [vmem:[%s4] sm:$0x1]
    %v114 = vlaneseq
    %v115 = vshrl.u32 %v114, 7
    %v116 = vsub.s32 0, %v115
    %v117 = vrot.slane %v112, %v116
    %v127 = vunpack.c.l.b16 %v104
    %v128 = vunpack.c.l.b16 %v105
    %v129 = vunpack.c.l.b16 %v106
    %v130 = vunpack.c.l.b16 %v107
    %v131 = vunpack.c.l.b16 %v108
    %v132 = vunpack.c.l.b16 %v109
    %v133 = vunpack.c.l.b16 %v110
    %v134 = vunpack.c.l.b16 %v111
    %v135 = vpack.c.b16 %v128, %v127
    %v136 = vpack.c.b16 %v130, %v129
    %v137 = vpack.c.b16 %v132, %v131
    %v138 = vpack.c.b16 %v134, %v133
    %vm143 = vcmask 523264
    %v145 = vsel %vm143, %v103, 0
    %147 = vmatprep.subr.bf16.mxu0 0
    %148 = vmatpush1.bf16.msra.mxu0 %v135
    %149 = vmatprep.subr.bf16.mxu0 0
    %150 = vmatpush1.bf16.msra.mxu0 %v136
    %151 = vmatprep.subr.bf16.mxu0 0
    %152 = vmatpush1.bf16.msra.mxu0 %v137
    %153 = vmatprep.subr.bf16.mxu0 0
    %154 = vmatpush1.bf16.msra.mxu0 %v138
    %155 = vmatprep.subr.bf16.mxu0 0
    %156 = vmatpush1.bf16.msra.mxu0 0
    %157 = vmatprep.subr.bf16.mxu0 0
    %158 = vmatpush1.bf16.msra.mxu0 0
    %159 = vmatprep.subr.bf16.mxu0 0
    %160 = vmatpush1.bf16.msra.mxu0 0
    %161 = vmatprep.subr.bf16.mxu0 0
    %162 = vmatpush1.bf16.msra.mxu0 0
    %163 = vmatprep.subr.bf16.mxu0 0
    %164 = vmatpush1.bf16.msra.mxu0 0
    %165 = vmatprep.subr.bf16.mxu0 0
    %166 = vmatpush1.bf16.msra.mxu0 0
    %167 = vmatprep.subr.bf16.mxu0 0
    %168 = vmatpush1.bf16.msra.mxu0 0
    %169 = vmatprep.subr.bf16.mxu0 0
    %170 = vmatpush1.bf16.msra.mxu0 0
    %171 = vmatprep.subr.bf16.mxu0 0
    %172 = vmatpush1.bf16.msra.mxu0 0
    %173 = vmatprep.subr.bf16.mxu0 0
    %174 = vmatpush1.bf16.msra.mxu0 0
    %175 = vmatprep.subr.bf16.mxu0 0
    %176 = vmatpush1.bf16.msra.mxu0 0
    %177 = vmatprep.subr.bf16.mxu0 0
    %178 = vmatpush1.bf16.msra.mxu0 0
    %179 = vmatprep.mubr.bf16.mxu0 0
    %180 = vmatmul.mubr.bf16.gmra.mrb[0].mxu0 %v145
    %v181 = vpop.f32.mrb[0].mxu0
    %v182 = vadd.f32 %v117, %v181
    %v183 = vpop.f32.mrb[0].mxu0
    %v184 = vpop.f32.mrb[0].mxu0
    %v185 = vpop.f32.mrb[0].mxu0
    %186 = vdwg.mxu0
    %v187 = vmax.f32 %v182, 0.0
    %v188 = vpack.c.bf16 %v187, %v187
    %v189 = vld [vmem:[%s5] sm:$0xf]
    %v190 = vld [vmem:[%s5 + $0x4] sm:$0xf]
    %v191 = vld [vmem:[%s5 + $0x8] sm:$0xf]
    %v192 = vld [vmem:[%s5 + $0xc] sm:$0xf]
    %v193 = vld [vmem:[%s5 + $0x10] sm:$0xf]
    %v194 = vld [vmem:[%s5 + $0x14] sm:$0xf]
    %v195 = vld [vmem:[%s5 + $0x18] sm:$0xf]
    %v196 = vld [vmem:[%s5 + $0x1c] sm:$0xf]
    %v197 = vld [vmem:[%s6] sm:$0x1]
    %v199 = vlaneseq
    %v200 = vshrl.u32 %v199, 7
    %v201 = vsub.s32 0, %v200
    %v202 = vrot.slane %v197, %v201
    %v212 = vunpack.c.l.b16 %v189
    %v213 = vunpack.c.l.b16 %v190
    %v214 = vunpack.c.l.b16 %v191
    %v215 = vunpack.c.l.b16 %v192
    %v216 = vunpack.c.l.b16 %v193
    %v217 = vunpack.c.l.b16 %v194
    %v218 = vunpack.c.l.b16 %v195
    %v219 = vunpack.c.l.b16 %v196
    %v220 = vpack.c.b16 %v213, %v212
    %v221 = vpack.c.b16 %v215, %v214
    %v222 = vpack.c.b16 %v217, %v216
    %v223 = vpack.c.b16 %v219, %v218
    %v229 = vsel %vm143, %v188, 0
    %231 = vmatprep.subr.bf16.mxu0 0
    %232 = vmatpush1.bf16.msra.mxu0 %v220
    %233 = vmatprep.subr.bf16.mxu0 0
    %234 = vmatpush1.bf16.msra.mxu0 %v221
    %235 = vmatprep.subr.bf16.mxu0 0
    %236 = vmatpush1.bf16.msra.mxu0 %v222
    %237 = vmatprep.subr.bf16.mxu0 0
    %238 = vmatpush1.bf16.msra.mxu0 %v223
    %239 = vmatprep.subr.bf16.mxu0 0
    %240 = vmatpush1.bf16.msra.mxu0 0
    %241 = vmatprep.subr.bf16.mxu0 0
    %242 = vmatpush1.bf16.msra.mxu0 0
    %243 = vmatprep.subr.bf16.mxu0 0
    %244 = vmatpush1.bf16.msra.mxu0 0
    %245 = vmatprep.subr.bf16.mxu0 0
    %246 = vmatpush1.bf16.msra.mxu0 0
    %247 = vmatprep.subr.bf16.mxu0 0
    %248 = vmatpush1.bf16.msra.mxu0 0
    %249 = vmatprep.subr.bf16.mxu0 0
    %250 = vmatpush1.bf16.msra.mxu0 0
    %251 = vmatprep.subr.bf16.mxu0 0
    %252 = vmatpush1.bf16.msra.mxu0 0
    %253 = vmatprep.subr.bf16.mxu0 0
    %254 = vmatpush1.bf16.msra.mxu0 0
    %255 = vmatprep.subr.bf16.mxu0 0
    %256 = vmatpush1.bf16.msra.mxu0 0
    %257 = vmatprep.subr.bf16.mxu0 0
    %258 = vmatpush1.bf16.msra.mxu0 0
    %259 = vmatprep.subr.bf16.mxu0 0
    %260 = vmatpush1.bf16.msra.mxu0 0
    %261 = vmatprep.subr.bf16.mxu0 0
    %262 = vmatpush1.bf16.msra.mxu0 0
    %263 = vmatprep.mubr.bf16.mxu0 0
    %264 = vmatmul.mubr.bf16.gmra.mrb[0].mxu0 %v229
    %v265 = vpop.f32.mrb[0].mxu0
    %v266 = vadd.f32 %v202, %v265
    %v267 = vpop.f32.mrb[0].mxu0
    %v268 = vpop.f32.mrb[0].mxu0
    %v269 = vpop.f32.mrb[0].mxu0
    %270 = vdwg.mxu0
    %vm271 = vcmask 31744
    %272 = vst.msk [vmem:[%s7] sm:$0xff] %vm271, %v266
    // Predicated region
    $region34: #{tpu_custom_call.1} parent=1 // pred_check
      _
    $region35: #{tpu_custom_call.1} parent=1 // pred_check_branch
      %274 = sbr.rel (0) target = $region37
    $region36: #{tpu_custom_call.1} parent=1 // pred_region
      _
    $region37: #{tpu_custom_call.1} parent=1 // pred_fallthru
      _
    // Predicated region
    $region38: #{tpu_custom_call.1} parent=1 // pred_check
      _
    $region39: #{tpu_custom_call.1} parent=1 // pred_check_branch
      %276 = sbr.rel (0) target = $region41
    $region40: #{tpu_custom_call.1} parent=1 // pred_region
      _
    $region41: #{tpu_custom_call.1} parent=1 // pred_fallthru
      _
    %277 = vsyncpa [#allocation3], 1

</llo_original>
